<compile_context>
chip_gen: v5e
topology: v5e:2x2
jax: 0.10.0
libtpu: 0.0.40
codegen_flags: <defaults>
</compile_context>

<pallas_src>
import functools

import jax
import jax.numpy as jnp
from jax.experimental import pallas as pl
from jax.experimental.pallas import tpu as pltpu

_VMEM_LIMIT_BYTES = 48 * 1024 * 1024        # safe on all gens incl. v7x (64 MiB physical)
_FUSED_SLAB_F32_LIMIT = 4 * 1024 * 1024     # fuse pool+MLP+gate when C*HW*4B <= 4 MiB
_FALLBACK_BLOCK_BUDGET = 24 * 1024 * 1024   # budget for 4 double-buffered x/out blocks


# ----------------------------------------------------------------------------
# Fused kernel: pool + excitation MLP + gate on one resident (C, HW) slab.
# ----------------------------------------------------------------------------
def _fused_se_kernel(x_ref, w1_ref, w2_ref, o_ref, *, inv_hw):
    x = x_ref[...]                                                       # (C, HW) native dtype
    s = jnp.sum(x.astype(jnp.float32), axis=-1, keepdims=True) * inv_hw  # (C, 1) f32 mean
    h = jnp.maximum(
        jnp.dot(w1_ref[...].astype(jnp.float32), s,
                preferred_element_type=jnp.float32), 0.0)                # (Cr, 1)
    g = jax.nn.sigmoid(
        jnp.dot(w2_ref[...].astype(jnp.float32), h,
                preferred_element_type=jnp.float32))                     # (C, 1)
    o_ref[...] = x * g.astype(x.dtype)                                   # broadcast over lanes


# ----------------------------------------------------------------------------
# Fallback pass 1: per-channel partial sums, accumulated over the HW-tile axis.
# ----------------------------------------------------------------------------
def _pool_kernel(x_ref, s_ref):
    @pl.when(pl.program_id(1) == 0)
    def _():
        s_ref[...] = jnp.zeros_like(s_ref)
    s_ref[...] += jnp.sum(x_ref[...].astype(jnp.float32), axis=-1, keepdims=True)


# ----------------------------------------------------------------------------
# Fallback pass 2: apply the per-(sample, channel) gate.
# ----------------------------------------------------------------------------
def _apply_gate_kernel(x_ref, g_ref, o_ref):
    o_ref[...] = x_ref[...] * g_ref[...]            # (C, thw) * (C, 1) broadcast


def _pick_hw_tile(hw, c, dsize, block_budget_bytes):
    """Largest HW tile that divides HW, is (ideally) a multiple of 128, and keeps
    4 double-buffered (C, thw) blocks within the VMEM block budget."""
    max_thw = max(128, block_budget_bytes // (4 * c * dsize))
    if hw <= max_thw:
        return hw
    t = (max_thw // 128) * 128
    while t >= 128:
        if hw % t == 0:
            return t
        t -= 128
    # Ragged spatial extents: largest divisor of hw that fits the budget.
    t = int(max_thw)
    while t > 1:
        if hw % t == 0:
            return t
        t -= 1
    return 1


def squeeze_excite(x_nchw, w1, w2):
    """Squeeze_Excite.forward.  x: (N,C,H,W); w1: (C//r, C); w2: (C, C//r).
    Dtype-preserving: output has x's dtype; sums/MLP accumulate in f32."""
    N, C, H, W = x_nchw.shape
    HW = H * W
    Cr = w1.shape[0]
    dtype = x_nchw.dtype
    dsize = jnp.dtype(dtype).itemsize
    x = x_nchw.reshape(N, C, HW)

    if C * HW * 4 <= _FUSED_SLAB_F32_LIMIT:
        # ---- Fused single-pass path: x read once, written once. ----
        y = pl.pallas_call(
            functools.partial(_fused_se_kernel, inv_hw=1.0 / HW),
            out_shape=jax.ShapeDtypeStruct((N, C, HW), dtype),
            grid_spec=pltpu.PrefetchScalarGridSpec(
                num_scalar_prefetch=0,
                grid=(N,),
                in_specs=[pl.BlockSpec((pl.Squeezed(), C, HW), lambda n: (n, 0, 0)),
                          pl.BlockSpec((Cr, C), lambda n: (0, 0)),
                          pl.BlockSpec((C, Cr), lambda n: (0, 0))],
                out_specs=pl.BlockSpec((pl.Squeezed(), C, HW), lambda n: (n, 0, 0))),
            compiler_params=pltpu.CompilerParams(
                dimension_semantics=("parallel",),
                vmem_limit_bytes=_VMEM_LIMIT_BYTES),
            input_output_aliases={0: 0},
            cost_estimate=pl.CostEstimate(
                flops=3 * N * C * HW + 4 * N * C * Cr,
                transcendentals=N * (C + Cr),
                bytes_accessed=2 * N * C * HW * dsize),
        )(x, w1, w2)
        return y.reshape(N, C, H, W)

    # ---- Fallback for slabs too large for a single resident block ----
    # (1) tiled channel-sum reduction, (2) tiny batched excitation MLP in XLA,
    # (3) tiled, lane-dense gate application.
    thw = _pick_hw_tile(HW, C, dsize, _FALLBACK_BLOCK_BUDGET)
    T = HW // thw

    sums = pl.pallas_call(
        _pool_kernel,
        out_shape=jax.ShapeDtypeStruct((N, C, 1), jnp.float32),
        grid_spec=pltpu.PrefetchScalarGridSpec(
            num_scalar_prefetch=0,
            grid=(N, T),
            in_specs=[pl.BlockSpec((pl.Squeezed(), C, thw), lambda n, t: (n, 0, t))],
            out_specs=pl.BlockSpec((pl.Squeezed(), C, 1), lambda n, t: (n, 0, 0))),
        compiler_params=pltpu.CompilerParams(
            dimension_semantics=("parallel", "arbitrary"),
            vmem_limit_bytes=_VMEM_LIMIT_BYTES),
        cost_estimate=pl.CostEstimate(
            flops=N * C * HW, transcendentals=0,
            bytes_accessed=N * C * HW * dsize),
    )(x)

    # Excitation MLP once for all samples (tiny: (N,C)@(C,Cr), (N,Cr)@(Cr,C)).
    # Note: on v7x with very small N the reduction grid above could additionally be
    # split across both TensorCores (grid (N, 2, T//2) with a 'parallel' middle axis).
    mean = sums[:, :, 0] * jnp.float32(1.0 / HW)                           # (N, C) f32
    h = jax.nn.relu(jnp.dot(mean, w1.astype(jnp.float32).T,
                            precision=jax.lax.Precision.HIGHEST))
    gate = jax.nn.sigmoid(jnp.dot(h, w2.astype(jnp.float32).T,
                                  precision=jax.lax.Precision.HIGHEST))
    gate = gate.astype(dtype)[:, :, None]                                  # (N, C, 1)

    y = pl.pallas_call(
        _apply_gate_kernel,
        out_shape=jax.ShapeDtypeStruct((N, C, HW), dtype),
        grid_spec=pltpu.PrefetchScalarGridSpec(
            num_scalar_prefetch=0,
            grid=(N, T),
            in_specs=[pl.BlockSpec((pl.Squeezed(), C, thw), lambda n, t: (n, 0, t)),
                      pl.BlockSpec((pl.Squeezed(), C, 1), lambda n, t: (n, 0, 0))],
            out_specs=pl.BlockSpec((pl.Squeezed(), C, thw), lambda n, t: (n, 0, t))),
        compiler_params=pltpu.CompilerParams(
            dimension_semantics=("parallel", "parallel"),
            vmem_limit_bytes=_VMEM_LIMIT_BYTES),
        input_output_aliases={0: 0},
        cost_estimate=pl.CostEstimate(
            flops=N * C * HW, transcendentals=0,
            bytes_accessed=2 * N * C * HW * dsize),
    )(x, gate)
    return y.reshape(N, C, H, W)


# ----------------------------------------------------------------------------
# Pure-JAX reference (matches the PyTorch module semantics).
# ----------------------------------------------------------------------------
def squeeze_excite_ref(x, w1, w2):
    s = jnp.mean(x.astype(jnp.float32), axis=(2, 3))                       # (N, C)
    h = jax.nn.relu(jnp.dot(s, w1.astype(jnp.float32).T,
                            precision=jax.lax.Precision.HIGHEST))
    g = jax.nn.sigmoid(jnp.dot(h, w2.astype(jnp.float32).T,
                               precision=jax.lax.Precision.HIGHEST))
    return x * g.astype(x.dtype)[:, :, None, None]


if __name__ == "__main__":
    key = jax.random.PRNGKey(0)
    kx, k1, k2, kx2, k3, k4 = jax.random.split(key, 6)

    # ---- Test 1: small feature map -> fused single-pass kernel path ----
    N, C, H, W = 2, 64, 16, 16
    reduction = 8
    Cr = C // reduction
    x = jax.random.normal(kx, (N, C, H, W), jnp.float32)
    # nn.Linear(C, Cr, bias=False) / nn.Linear(Cr, C, bias=False) weights in the
    # PyTorch-native (out_features, in_features) layout.
    w1 = jax.random.uniform(k1, (Cr, C), jnp.float32, -1.0, 1.0) / jnp.sqrt(C)
    w2 = jax.random.uniform(k2, (C, Cr), jnp.float32, -1.0, 1.0) / jnp.sqrt(Cr)

    out = jax.block_until_ready(jax.jit(squeeze_excite)(x, w1, w2))
    ref = squeeze_excite_ref(x, w1, w2)
    assert out.shape == x.shape and out.dtype == x.dtype, (out.shape, out.dtype)
    assert bool(jnp.all(jnp.isfinite(out)))
    err1 = float(jnp.max(jnp.abs(out - ref)))
    assert err1 < 1e-3, err1

    # ---- Test 2: large feature map -> tiled two-pass fallback path ----
    N2, C2, H2, W2 = 1, 8, 512, 512
    Cr2 = C2 // reduction
    x2 = jax.random.normal(kx2, (N2, C2, H2, W2), jnp.float32)
    w1b = jax.random.uniform(k3, (Cr2, C2), jnp.float32, -1.0, 1.0) / jnp.sqrt(C2)
    w2b = jax.random.uniform(k4, (C2, Cr2), jnp.float32, -1.0, 1.0) / jnp.sqrt(Cr2)

    out2 = jax.block_until_ready(jax.jit(squeeze_excite)(x2, w1b, w2b))
    ref2 = squeeze_excite_ref(x2, w1b, w2b)
    assert out2.shape == x2.shape and out2.dtype == x2.dtype
    err2 = float(jnp.max(jnp.abs(out2 - ref2)))
    assert err2 < 1e-3, err2

    print("KERNEL_OK")
</pallas_src>

<mosaic_0001>
module attributes {stable_mosaic.version = 11 : i64} {
  func.func @_fused_se_kernel(%arg0: i32, %arg1: memref<1x64x256xf32, #tpu.memory_space<vmem>>, %arg2: memref<8x64xf32, #tpu.memory_space<vmem>>, %arg3: memref<64x8xf32, #tpu.memory_space<vmem>>, %arg4: memref<1x64x256xf32, #tpu.memory_space<vmem>>) attributes {dimension_semantics = [#tpu.dimension_semantics<parallel>], iteration_bounds = array<i64: 2>, scalar_prefetch = 0 : i64, scratch_operands = 0 : i64, tpu.core_type = #tpu.core_type<tc>, window_params = [{transform_indices = @transform_0, window_bounds = array<i64: 1, 64, 256>}, {pipeline_mode = #tpu.pipeline_mode<synchronous>, transform_indices = @transform_1, window_bounds = array<i64: 8, 64>}, {pipeline_mode = #tpu.pipeline_mode<synchronous>, transform_indices = @transform_2, window_bounds = array<i64: 64, 8>}, {transform_indices = @transform_3, window_bounds = array<i64: 1, 64, 256>}]} {
    %c0 = arith.constant 0 : index
    %c0_0 = arith.constant 0 : index
    %c0_1 = arith.constant 0 : index
    %0 = vector.load %arg1[%c0, %c0_0, %c0_1] : memref<1x64x256xf32, #tpu.memory_space<vmem>>, vector<1x64x256xf32>
    %1 = vector.shape_cast %0 : vector<1x64x256xf32> to vector<64x256xf32>
    %cst = arith.constant dense<0.000000e+00> : vector<64xf32>
    %2 = vector.multi_reduction <add>, %1, %cst [1] : vector<64x256xf32> to vector<64xf32>
    %3 = vector.shape_cast %2 : vector<64xf32> to vector<64x1xf32>
    %cst_2 = arith.constant 3.906250e-03 : f32
    %4 = vector.broadcast %cst_2 : f32 to vector<64x1xf32>
    %5 = arith.mulf %3, %4 : vector<64x1xf32>
    %c0_3 = arith.constant 0 : index
    %c0_4 = arith.constant 0 : index
    %6 = vector.load %arg2[%c0_3, %c0_4] : memref<8x64xf32, #tpu.memory_space<vmem>>, vector<8x64xf32>
    %cst_5 = arith.constant dense<0.000000e+00> : vector<8x1xf32>
    %7 = tpu.matmul %6, %5, %cst_5 {dimension_numbers = #tpu.dot_dimension_numbers<[1], [0], [0], [1], [0, 0, 1, 1], [], []>} : vector<8x64xf32>, vector<64x1xf32>, vector<8x1xf32> -> vector<8x1xf32>
    %cst_6 = arith.constant 0.000000e+00 : f32
    %8 = vector.broadcast %cst_6 : f32 to vector<8x1xf32>
    %9 = arith.maximumf %7, %8 : vector<8x1xf32>
    %c0_7 = arith.constant 0 : index
    %c0_8 = arith.constant 0 : index
    %10 = vector.load %arg3[%c0_7, %c0_8] : memref<64x8xf32, #tpu.memory_space<vmem>>, vector<64x8xf32>
    %cst_9 = arith.constant dense<0.000000e+00> : vector<64x1xf32>
    %11 = tpu.matmul %10, %9, %cst_9 {dimension_numbers = #tpu.dot_dimension_numbers<[1], [0], [0], [1], [0, 0, 1, 1], [], []>} : vector<64x8xf32>, vector<8x1xf32>, vector<64x1xf32> -> vector<64x1xf32>
    %12 = arith.negf %11 : vector<64x1xf32>
    %13 = math.exp %12 : vector<64x1xf32>
    %cst_10 = arith.constant 1.000000e+00 : f32
    %14 = vector.broadcast %cst_10 : f32 to vector<64x1xf32>
    %15 = arith.addf %14, %13 : vector<64x1xf32>
    %16 = arith.divf %14, %15 : vector<64x1xf32>
    %17 = vector.broadcast %16 : vector<64x1xf32> to vector<64x256xf32>
    %18 = arith.mulf %1, %17 : vector<64x256xf32>
    %c0_11 = arith.constant 0 : index
    %c0_12 = arith.constant 0 : index
    %c0_13 = arith.constant 0 : index
    %19 = vector.load %arg4[%c0_11, %c0_12, %c0_13] : memref<1x64x256xf32, #tpu.memory_space<vmem>>, vector<1x64x256xf32>
    %20 = vector.shape_cast %19 : vector<1x64x256xf32> to vector<64x256xf32>
    %21 = vector.shape_cast %18 : vector<64x256xf32> to vector<1x64x256xf32>
    tpu.vector_store %arg4[%c0_11, %c0_12, %c0_13], %21 {strides = array<i32>} : memref<1x64x256xf32, #tpu.memory_space<vmem>>, vector<1x64x256xf32>,
    return
  }
  func.func @transform_0(%arg0: i32) -> (i32, i32, i32) {
    %c0_i32 = arith.constant 0 : i32
    %c0_i32_0 = arith.constant 0 : i32
    %c0_i32_1 = arith.constant 0 : i32
    return %arg0, %c0_i32, %c0_i32_0 : i32, i32, i32
  }
  func.func @transform_1(%arg0: i32) -> (i32, i32) {
    %c0_i32 = arith.constant 0 : i32
    %c0_i32_0 = arith.constant 0 : i32
    %c0_i32_1 = arith.constant 0 : i32
    return %c0_i32, %c0_i32_0 : i32, i32
  }
  func.func @transform_2(%arg0: i32) -> (i32, i32) {
    %c0_i32 = arith.constant 0 : i32
    %c0_i32_0 = arith.constant 0 : i32
    %c0_i32_1 = arith.constant 0 : i32
    return %c0_i32, %c0_i32_0 : i32, i32
  }
  func.func @transform_3(%arg0: i32) -> (i32, i32, i32) {
    %c0_i32 = arith.constant 0 : i32
    %c0_i32_0 = arith.constant 0 : i32
    %c0_i32_1 = arith.constant 0 : i32
    return %arg0, %c0_i32, %c0_i32_0 : i32, i32, i32
  }
}

</mosaic_0001>

<llo_original>
// kernel: squeeze_excite.1
$region0: #{squeeze_excite.1}
  #allocation0 [shape = 'u32[]', space=smem, size = 0x4, offset = 0x4, fixed_abs, tag = 'smem constant byte address 0x4 - core index']
  #allocation1 [shape = 'u32[72,128]{1,0:T(1,128)}', space=vmem, size = 0x9000, scoped, tag = 'internal scratch']
  %s0 = inlined_call_operand.vmem [shape: f32[2,64,256], index: 0, kind: input, shape index: {}, may-alias: {0,3}]
  %s1 = inlined_call_operand.vmem [shape: f32[8,64], index: 1, kind: input, shape index: {}]
  %s2 = inlined_call_operand.vmem [shape: f32[64,8], index: 2, kind: input, shape index: {}]
  %s3 = inlined_call_operand.vmem [shape: f32[2,64,256], index: 3, kind: output, shape index: {}, may-alias: {0,3}]
  %s4 = sld [smem:[#allocation0]]
  $region45: #{squeeze_excite.1} parent=0
    _
  %s6 = ssub.s32 1, %s4
  %s7 = scalar_select 0, %s6, %s4
  loop: start=0, step=1, limit=4
  $region2: #{squeeze_excite.1} parent=0 // loop_pre_header
    _
  $region3: #{squeeze_excite.1} parent=0 // loop_header
    %s9 = sphi 0, %s13
    %p10 = scmp.ge.s32.totalorder %s9, 4
    %s19 = sphi 0, %s21
    %s22 = sphi 0, %s19
    %s23 = sphi 0, %s22
    %s39 = sphi 0, %s23
    %s43 = sphi 0, %s43
    %s45 = sphi 0, %s43
    %s46 = sphi 0, %s45
    %s60 = sphi 0, %s46
    %s64 = sphi 0, %s64
    %s66 = sphi 0, %s64
    %s67 = sphi 0, %s66
    %s81 = sphi 0, %s67
    %s87 = sphi 0, %s89
    %s90 = sphi 0, %s87
    %s91 = sphi 0, %s90
    %s107 = sphi 0, %s91
  $region4: #{squeeze_excite.1} parent=0 // loop_header_branch
    %12 = sbr.rel (%p10) target = $region8
  $region5: #{squeeze_excite.1} parent=0 // loop_body
    %s14 = ssub.s32 %s9, 1
    %s15 = ssub.s32 %s9, 2
    %s16 = sadd.s32 %s9, 1
    %s17 = ssub.s32 %s9, %s16
    %p18 = scmp.eq.s32.totalorder %s17, 0
    %s20 = sadd.s32 %s19, 1
    %s21 = scalar_select %p18, %s19, %s20
    %p24 = pneg %p18
    %p25 = scmp.eq.s32.totalorder %s9, 1
    %p26 = por %p24, %p25
    %p27 = scmp.ne.s32.totalorder %s19, %s22
    %p28 = scmp.eq.s32.totalorder %s9, 0
    %p29 = por %p27, %p28
    %p30 = scmp.ne.s32.totalorder %s19, %s22
    %p31 = scmp.eq.s32.totalorder %s14, 1
    %p32 = por %p30, %p31
    %p33 = scmp.ne.s32.totalorder %s22, %s23
    %p34 = scmp.eq.s32.totalorder %s14, 0
    %p35 = por %p33, %p34
    %p36 = scmp.ne.s32.totalorder %s22, %s23
    %p37 = scmp.eq.s32.totalorder %s15, 1
    %p38 = por %p36, %p37
    %p40 = scmp.ne.s32.totalorder %s23, %s39
    %p41 = scmp.eq.s32.totalorder %s15, 0
    %p42 = por %p40, %p41
    %s44 = sadd.s32 %s43, 1
    %p47 = scmp.eq.s32.totalorder %s9, 1
    %p48 = scmp.ne.s32.totalorder %s43, %s45
    %p49 = scmp.eq.s32.totalorder %s9, 0
    %p50 = por %p48, %p49
    %p51 = scmp.ne.s32.totalorder %s43, %s45
    %p52 = scmp.eq.s32.totalorder %s14, 1
    %p53 = por %p51, %p52
    %p54 = scmp.ne.s32.totalorder %s45, %s46
    %p55 = scmp.eq.s32.totalorder %s14, 0
    %p56 = por %p54, %p55
    %p57 = scmp.ne.s32.totalorder %s45, %s46
    %p58 = scmp.eq.s32.totalorder %s15, 1
    %p59 = por %p57, %p58
    %p61 = scmp.ne.s32.totalorder %s46, %s60
    %p62 = scmp.eq.s32.totalorder %s15, 0
    %p63 = por %p61, %p62
    %s65 = sadd.s32 %s64, 1
    %p68 = scmp.eq.s32.totalorder %s9, 1
    %p69 = scmp.ne.s32.totalorder %s64, %s66
    %p70 = scmp.eq.s32.totalorder %s9, 0
    %p71 = por %p69, %p70
    %p72 = scmp.ne.s32.totalorder %s64, %s66
    %p73 = scmp.eq.s32.totalorder %s14, 1
    %p74 = por %p72, %p73
    %p75 = scmp.ne.s32.totalorder %s66, %s67
    %p76 = scmp.eq.s32.totalorder %s14, 0
    %p77 = por %p75, %p76
    %p78 = scmp.ne.s32.totalorder %s66, %s67
    %p79 = scmp.eq.s32.totalorder %s15, 1
    %p80 = por %p78, %p79
    %p82 = scmp.ne.s32.totalorder %s67, %s81
    %p83 = scmp.eq.s32.totalorder %s15, 0
    %p84 = por %p82, %p83
    %s85 = ssub.s32 %s9, %s16
    %p86 = scmp.eq.s32.totalorder %s85, 0
    %s88 = sadd.s32 %s87, 1
    %s89 = scalar_select %p86, %s87, %s88
    %p92 = pneg %p86
    %p93 = scmp.eq.s32.totalorder %s9, 1
    %p94 = por %p92, %p93
    %p95 = scmp.ne.s32.totalorder %s87, %s90
    %p96 = scmp.eq.s32.totalorder %s9, 0
    %p97 = por %p95, %p96
    %p98 = scmp.ne.s32.totalorder %s87, %s90
    %p99 = scmp.eq.s32.totalorder %s14, 1
    %p100 = por %p98, %p99
    %p101 = scmp.ne.s32.totalorder %s90, %s91
    %p102 = scmp.eq.s32.totalorder %s14, 0
    %p103 = por %p101, %p102
    %p104 = scmp.ne.s32.totalorder %s90, %s91
    %p105 = scmp.eq.s32.totalorder %s15, 1
    %p106 = por %p104, %p105
    %p108 = scmp.ne.s32.totalorder %s91, %s107
    %p109 = scmp.eq.s32.totalorder %s15, 0
    %p110 = por %p108, %p109
    %p111 = scmp.le.s32.totalorder 1, %s9
    %p112 = scmp.lt.s32.totalorder %s9, 3
    %p113 = pnand %p111, %p112
    %p114 = pneg %p113
    // Predicated region
    $region9: #{squeeze_excite.1} parent=5 // pred_check
      _
    $region10: #{squeeze_excite.1} parent=5 // pred_check_branch
      %116 = sbr.rel (%p113) target = $region12
    $region11: #{squeeze_excite.1} parent=5 // pred_region
      %s117 = ssub.s32 %s9, 1
      // Predicated region
      $region13: #{squeeze_excite.1} parent=11 // pred_check
        %p118 = pneg %p56
      $region14: #{squeeze_excite.1} parent=11 // pred_check_branch
        %120 = sbr.rel (%p118) target = $region16
      $region15: #{squeeze_excite.1} parent=11 // pred_region
        _
      $region16: #{squeeze_excite.1} parent=11 // pred_fallthru
        _
      // Predicated region
      $region17: #{squeeze_excite.1} parent=11 // pred_check
        %p121 = pneg %p77
      $region18: #{squeeze_excite.1} parent=11 // pred_check_branch
        %123 = sbr.rel (%p121) target = $region20
      $region19: #{squeeze_excite.1} parent=11 // pred_region
        _
      $region20: #{squeeze_excite.1} parent=11 // pred_fallthru
        _
    $region12: #{squeeze_excite.1} parent=5 // pred_fallthru
      _
    %p124 = scmp.lt.s32.totalorder %s9, 2
    // Predicated region
    $region21: #{squeeze_excite.1} parent=5 // pred_check
      %p125 = pneg %p124
    $region22: #{squeeze_excite.1} parent=5 // pred_check_branch
      %127 = sbr.rel (%p125) target = $region24
    $region23: #{squeeze_excite.1} parent=5 // pred_region
      // Predicated region
      $region25: #{squeeze_excite.1} parent=23 // pred_check
        %p128 = pneg %p29
      $region26: #{squeeze_excite.1} parent=23 // pred_check_branch
        %130 = sbr.rel (%p128) target = $region28
      $region27: #{squeeze_excite.1} parent=23 // pred_region
        %p131 = scmp.lt.s32.totalorder %s9, 1
        %s132 = scalar_select %p131, %s9, 1
        %s133 = smul.addr %s132, 16
        %s134 = smul.addr %s133, 8
        %s135 = scalar_lea.vmem %s0, %s134
      $region28: #{squeeze_excite.1} parent=23 // pred_fallthru
        _
    $region24: #{squeeze_excite.1} parent=5 // pred_fallthru
      _
    %p136 = scmp.le.s32.totalorder 1, %s9
    %p137 = scmp.lt.s32.totalorder %s9, 3
    %p138 = pnand %p136, %p137
    %p139 = pneg %p138
    // Predicated region
    $region29: #{squeeze_excite.1} parent=5 // pred_check
      _
    $region30: #{squeeze_excite.1} parent=5 // pred_check_branch
      %141 = sbr.rel (%p138) target = $region32
    $region31: #{squeeze_excite.1} parent=5 // pred_region
      %s142 = ssub.s32 %s9, 1
      %p143 = scmp.lt.s32.totalorder %s14, 1
      %s144 = scalar_select %p143, %s14, 1
      %s145 = smul.addr %s144, 16
      %s146 = smul.addr %s145, 8
      %s147 = scalar_lea.vmem %s0, %s146
      %p148 = pneg %p35
      %p149 = pneg %p32
      %p150 = pneg %p56
      %p151 = pneg %p53
      %p152 = pneg %p77
      %p153 = pneg %p74
      %p154 = pneg %p103
      %p155 = pneg %p100
      %p156 = scmp.lt.s32.totalorder %s14, 1
      %s157 = scalar_select %p156, %s14, 1
      %s158 = smul.addr %s157, 16
      %s159 = smul.addr %s158, 8
      %s160 = scalar_lea.vmem %s3, %s159
      %p161 = scmp.lt.s32.totalorder %s14, 1
      %s162 = scalar_select %p161, %s14, 1
      %s163 = smul.addr %s162, 16
      %s164 = smul.addr %s163, 8
      %s165 = scalar_lea.vmem %s0, %s164
      %p166 = scmp.lt.s32.totalorder %s14, 1
      %s167 = scalar_select %p166, %s14, 1
      %s168 = smul.addr %s167, 16
      %s169 = smul.addr %s168, 8
      %s170 = scalar_lea.vmem %s3, %s169
      %v171 = vld [vmem:[%s165] sm:$0xff]
      %v172 = vld [vmem:[%s165 + $0x8] sm:$0xff]
      %v173 = vld [vmem:[%s165 + $0x10] sm:$0xff]
      %v174 = vld [vmem:[%s165 + $0x18] sm:$0xff]
      %v175 = vld [vmem:[%s165 + $0x20] sm:$0xff]
      %v176 = vld [vmem:[%s165 + $0x28] sm:$0xff]
      %v177 = vld [vmem:[%s165 + $0x30] sm:$0xff]
      %v178 = vld [vmem:[%s165 + $0x38] sm:$0xff]
      %v179 = vld [vmem:[%s165 + $0x40] sm:$0xff]
      %v180 = vld [vmem:[%s165 + $0x48] sm:$0xff]
      %v181 = vld [vmem:[%s165 + $0x50] sm:$0xff]
      %v182 = vld [vmem:[%s165 + $0x58] sm:$0xff]
      %v183 = vld [vmem:[%s165 + $0x60] sm:$0xff]
      %v184 = vld [vmem:[%s165 + $0x68] sm:$0xff]
      %v185 = vld [vmem:[%s165 + $0x70] sm:$0xff]
      %v186 = vld [vmem:[%s165 + $0x78] sm:$0xff]
      %v187 = vadd.f32 %v171, %v172
      %188 = vadd.xlane.f32.xlu0 %v187
      %v189 = vpop.xlane.xlu0 %188
      %v190 = vadd.f32 %v173, %v174
      %191 = vadd.xlane.f32.xlu0 %v190
      %v192 = vpop.xlane.xlu0 %191
      %v193 = vadd.f32 %v175, %v176
      %194 = vadd.xlane.f32.xlu0 %v193
      %v195 = vpop.xlane.xlu0 %194
      %v196 = vadd.f32 %v177, %v178
      %197 = vadd.xlane.f32.xlu0 %v196
      %v198 = vpop.xlane.xlu0 %197
      %v199 = vadd.f32 %v179, %v180
      %200 = vadd.xlane.f32.xlu0 %v199
      %v201 = vpop.xlane.xlu0 %200
      %v202 = vadd.f32 %v181, %v182
      %203 = vadd.xlane.f32.xlu0 %v202
      %v204 = vpop.xlane.xlu0 %203
      %v205 = vadd.f32 %v183, %v184
      %206 = vadd.xlane.f32.xlu0 %v205
      %v207 = vpop.xlane.xlu0 %206
      %v208 = vadd.f32 %v185, %v186
      %209 = vadd.xlane.f32.xlu0 %v208
      %v210 = vpop.xlane.xlu0 %209
      %v211 = vmul.f32 %v189, 0.00390625
      %v212 = vmul.f32 %v192, 0.00390625
      %v213 = vmul.f32 %v195, 0.00390625
      %v214 = vmul.f32 %v198, 0.00390625
      %v215 = vmul.f32 %v201, 0.00390625
      %v216 = vmul.f32 %v204, 0.00390625
      %v217 = vmul.f32 %v207, 0.00390625
      %v218 = vmul.f32 %v210, 0.00390625
      %v219 = vld [vmem:[%s1] sm:$0xff]
      %vm220 = vcmask 523264
      %v222 = vsel %vm220, %v219, 0
      %224 = vmatpush.msra.mxu0 0.0
      %225 = vmatpush.msra.mxu0 0.0
      %226 = vmatpush.msra.mxu0 0.0
      %227 = vmatpush.msra.mxu0 0.0
      %228 = vmatpush.msra.mxu0 0.0
      %229 = vmatpush.msra.mxu0 0.0
      %230 = vmatpush.msra.mxu0 0.0
      %231 = vmatpush.msra.mxu0 0.0
      %232 = vmatpush.msra.mxu0 %v218
      %233 = vmatpush.msra.mxu0 %v217
      %234 = vmatpush.msra.mxu0 %v216
      %235 = vmatpush.msra.mxu0 %v215
      %236 = vmatpush.msra.mxu0 %v214
      %237 = vmatpush.msra.mxu0 %v213
      %238 = vmatpush.msra.mxu0 %v212
      %239 = vmatpush.msra.mxu0 %v211
      %240 = vmatmul.f32.gmra.mxu0 %v222
      %v241 = vpop.f32.mrf.mxu0
      %v242 = vadd.f32 0.0, %v241
      %243 = vdwg.mxu0
      %v244 = vmax.f32 %v242, 0.0
      %v245 = vld [vmem:[%s2] sm:$0xff]
      %v246 = vld [vmem:[%s2 + $0x8] sm:$0xff]
      %v247 = vld [vmem:[%s2 + $0x10] sm:$0xff]
      %v248 = vld [vmem:[%s2 + $0x18] sm:$0xff]
      %v249 = vld [vmem:[%s2 + $0x20] sm:$0xff]
      %v250 = vld [vmem:[%s2 + $0x28] sm:$0xff]
      %v251 = vld [vmem:[%s2 + $0x30] sm:$0xff]
      %v252 = vld [vmem:[%s2 + $0x38] sm:$0xff]
      %vm253 = vcmask 64512
      %v255 = vsel %vm253, %v245, 0
      %v258 = vsel %vm253, %v246, 0
      %v261 = vsel %vm253, %v247, 0
      %v264 = vsel %vm253, %v248, 0
      %v267 = vsel %vm253, %v249, 0
      %v270 = vsel %vm253, %v250, 0
      %v273 = vsel %vm253, %v251, 0
      %v276 = vsel %vm253, %v252, 0
      %278 = vmatpush.msra.mxu0 0.0
      %279 = vmatpush.msra.mxu0 0.0
      %280 = vmatpush.msra.mxu0 0.0
      %281 = vmatpush.msra.mxu0 0.0
      %282 = vmatpush.msra.mxu0 0.0
      %283 = vmatpush.msra.mxu0 0.0
      %284 = vmatpush.msra.mxu0 0.0
      %285 = vmatpush.msra.mxu0 0.0
      %286 = vmatpush.msra.mxu0 0.0
      %287 = vmatpush.msra.mxu0 0.0
      %288 = vmatpush.msra.mxu0 0.0
      %289 = vmatpush.msra.mxu0 0.0
      %290 = vmatpush.msra.mxu0 0.0
      %291 = vmatpush.msra.mxu0 0.0
      %292 = vmatpush.msra.mxu0 0.0
      %293 = vmatpush.msra.mxu0 %v244
      %294 = vmatmul.f32.gmra.mxu0 %v255
      %v295 = vpop.f32.mrf.mxu0
      %v296 = vadd.f32 0.0, %v295
      %297 = vmatmul.f32.gmra.mxu0 %v258
      %v298 = vpop.f32.mrf.mxu0
      %v299 = vadd.f32 0.0, %v298
      %300 = vmatmul.f32.gmra.mxu0 %v261
      %v301 = vpop.f32.mrf.mxu0
      %v302 = vadd.f32 0.0, %v301
      %303 = vmatmul.f32.gmra.mxu0 %v264
      %v304 = vpop.f32.mrf.mxu0
      %v305 = vadd.f32 0.0, %v304
      %306 = vmatmul.f32.gmra.mxu0 %v267
      %v307 = vpop.f32.mrf.mxu0
      %v308 = vadd.f32 0.0, %v307
      %309 = vmatmul.f32.gmra.mxu0 %v270
      %v310 = vpop.f32.mrf.mxu0
      %v311 = vadd.f32 0.0, %v310
      %312 = vmatmul.f32.gmra.mxu0 %v273
      %v313 = vpop.f32.mrf.mxu0
      %v314 = vadd.f32 0.0, %v313
      %315 = vmatmul.f32.gmra.mxu0 %v276
      %v316 = vpop.f32.mrf.mxu0
      %v317 = vadd.f32 0.0, %v316
      %318 = vdwg.mxu0
      %v319 = vxor.u32 %v296, 2147483648
      %v320 = vxor.u32 %v299, 2147483648
      %v321 = vxor.u32 %v302, 2147483648
      %v322 = vxor.u32 %v305, 2147483648
      %v323 = vxor.u32 %v308, 2147483648
      %v324 = vxor.u32 %v311, 2147483648
      %v325 = vxor.u32 %v314, 2147483648
      %v326 = vxor.u32 %v317, 2147483648
      %v327 = vmul.f32 %v319, 1.442695
      %v328 = vpow.pop %v327
      %v329 = vmul.f32 %v320, 1.442695
      %v330 = vpow.pop %v329
      %v331 = vmul.f32 %v321, 1.442695
      %v332 = vpow.pop %v331
      %v333 = vmul.f32 %v322, 1.442695
      %v334 = vpow.pop %v333
      %v335 = vmul.f32 %v323, 1.442695
      %v336 = vpow.pop %v335
      %v337 = vmul.f32 %v324, 1.442695
      %v338 = vpow.pop %v337
      %v339 = vmul.f32 %v325, 1.442695
      %v340 = vpow.pop %v339
      %v341 = vmul.f32 %v326, 1.442695
      %v342 = vpow.pop %v341
      %v343 = vadd.f32 %v328, 1.0
      %v344 = vadd.f32 %v330, 1.0
      %v345 = vadd.f32 %v332, 1.0
      %v346 = vadd.f32 %v334, 1.0
      %v347 = vadd.f32 %v336, 1.0
      %v348 = vadd.f32 %v338, 1.0
      %v349 = vadd.f32 %v340, 1.0
      %v350 = vadd.f32 %v342, 1.0
      %v351 = vrcp.pop %v343
      %v352 = vmul.f32 %v343, %v351
      %v353 = vsub.f32 1.0, %v352
      %v354 = vmul.f32 %v351, %v353
      %v355 = vadd.f32 %v351, %v354
      %vm356 = vweird.f32 %v343
      %vm357 = vweird.f32 %v351
      %vm358 = vmor %vm356, %vm357
      %v359 = vsel %vm358, %v351, %v355
      %v360 = vand.u32 2147483647, %v343
      %vm361 = vcmp.eq.f32.partialorder %v360, 8.507059e+37
      %v362 = vand.u32 %v343, 2147483648
      %v363 = vor.u32 1.1754944e-38, %v362
      %v364 = vsel %vm361, %v363, %v359
      %v365 = vmul.f32 1.0, %v364
      %v366 = vrcp.pop %v344
      %v367 = vmul.f32 %v344, %v366
      %v368 = vsub.f32 1.0, %v367
      %v369 = vmul.f32 %v366, %v368
      %v370 = vadd.f32 %v366, %v369
      %vm371 = vweird.f32 %v344
      %vm372 = vweird.f32 %v366
      %vm373 = vmor %vm371, %vm372
      %v374 = vsel %vm373, %v366, %v370
      %v375 = vand.u32 2147483647, %v344
      %vm376 = vcmp.eq.f32.partialorder %v375, 8.507059e+37
      %v377 = vand.u32 %v344, 2147483648
      %v378 = vor.u32 1.1754944e-38, %v377
      %v379 = vsel %vm376, %v378, %v374
      %v380 = vmul.f32 1.0, %v379
      %v381 = vrcp.pop %v345
      %v382 = vmul.f32 %v345, %v381
      %v383 = vsub.f32 1.0, %v382
      %v384 = vmul.f32 %v381, %v383
      %v385 = vadd.f32 %v381, %v384
      %vm386 = vweird.f32 %v345
      %vm387 = vweird.f32 %v381
      %vm388 = vmor %vm386, %vm387
      %v389 = vsel %vm388, %v381, %v385
      %v390 = vand.u32 2147483647, %v345
      %vm391 = vcmp.eq.f32.partialorder %v390, 8.507059e+37
      %v392 = vand.u32 %v345, 2147483648
      %v393 = vor.u32 1.1754944e-38, %v392
      %v394 = vsel %vm391, %v393, %v389
      %v395 = vmul.f32 1.0, %v394
      %v396 = vrcp.pop %v346
      %v397 = vmul.f32 %v346, %v396
      %v398 = vsub.f32 1.0, %v397
      %v399 = vmul.f32 %v396, %v398
      %v400 = vadd.f32 %v396, %v399
      %vm401 = vweird.f32 %v346
      %vm402 = vweird.f32 %v396
      %vm403 = vmor %vm401, %vm402
      %v404 = vsel %vm403, %v396, %v400
      %v405 = vand.u32 2147483647, %v346
      %vm406 = vcmp.eq.f32.partialorder %v405, 8.507059e+37
      %v407 = vand.u32 %v346, 2147483648
      %v408 = vor.u32 1.1754944e-38, %v407
      %v409 = vsel %vm406, %v408, %v404
      %v410 = vmul.f32 1.0, %v409
      %v411 = vrcp.pop %v347
      %v412 = vmul.f32 %v347, %v411
      %v413 = vsub.f32 1.0, %v412
      %v414 = vmul.f32 %v411, %v413
      %v415 = vadd.f32 %v411, %v414
      %vm416 = vweird.f32 %v347
      %vm417 = vweird.f32 %v411
      %vm418 = vmor %vm416, %vm417
      %v419 = vsel %vm418, %v411, %v415
      %v420 = vand.u32 2147483647, %v347
      %vm421 = vcmp.eq.f32.partialorder %v420, 8.507059e+37
      %v422 = vand.u32 %v347, 2147483648
      %v423 = vor.u32 1.1754944e-38, %v422
      %v424 = vsel %vm421, %v423, %v419
      %v425 = vmul.f32 1.0, %v424
      %v426 = vrcp.pop %v348
      %v427 = vmul.f32 %v348, %v426
      %v428 = vsub.f32 1.0, %v427
      %v429 = vmul.f32 %v426, %v428
      %v430 = vadd.f32 %v426, %v429
      %vm431 = vweird.f32 %v348
      %vm432 = vweird.f32 %v426
      %vm433 = vmor %vm431, %vm432
      %v434 = vsel %vm433, %v426, %v430
      %v435 = vand.u32 2147483647, %v348
      %vm436 = vcmp.eq.f32.partialorder %v435, 8.507059e+37
      %v437 = vand.u32 %v348, 2147483648
      %v438 = vor.u32 1.1754944e-38, %v437
      %v439 = vsel %vm436, %v438, %v434
      %v440 = vmul.f32 1.0, %v439
      %v441 = vrcp.pop %v349
      %v442 = vmul.f32 %v349, %v441
      %v443 = vsub.f32 1.0, %v442
      %v444 = vmul.f32 %v441, %v443
      %v445 = vadd.f32 %v441, %v444
      %vm446 = vweird.f32 %v349
      %vm447 = vweird.f32 %v441
      %vm448 = vmor %vm446, %vm447
      %v449 = vsel %vm448, %v441, %v445
      %v450 = vand.u32 2147483647, %v349
      %vm451 = vcmp.eq.f32.partialorder %v450, 8.507059e+37
      %v452 = vand.u32 %v349, 2147483648
      %v453 = vor.u32 1.1754944e-38, %v452
      %v454 = vsel %vm451, %v453, %v449
      %v455 = vmul.f32 1.0, %v454
      %v456 = vrcp.pop %v350
      %v457 = vmul.f32 %v350, %v456
      %v458 = vsub.f32 1.0, %v457
      %v459 = vmul.f32 %v456, %v458
      %v460 = vadd.f32 %v456, %v459
      %vm461 = vweird.f32 %v350
      %vm462 = vweird.f32 %v456
      %vm463 = vmor %vm461, %vm462
      %v464 = vsel %vm463, %v456, %v460
      %v465 = vand.u32 2147483647, %v350
      %vm466 = vcmp.eq.f32.partialorder %v465, 8.507059e+37
      %v467 = vand.u32 %v350, 2147483648
      %v468 = vor.u32 1.1754944e-38, %v467
      %v469 = vsel %vm466, %v468, %v464
      %v470 = vmul.f32 1.0, %v469
      %472 = vset.pattern.permute.xlu0 0
      %473 = vperm.xlu0 %472, %v365
      %v474 = vpop.permute.xlu0 %473
      %477 = vset.pattern.permute.xlu0 0
      %478 = vperm.xlu0 %477, %v380
      %v479 = vpop.permute.xlu0 %478
      %482 = vset.pattern.permute.xlu0 0
      %483 = vperm.xlu0 %482, %v395
      %v484 = vpop.permute.xlu0 %483
      %487 = vset.pattern.permute.xlu0 0
      %488 = vperm.xlu0 %487, %v410
      %v489 = vpop.permute.xlu0 %488
      %492 = vset.pattern.permute.xlu0 0
      %493 = vperm.xlu0 %492, %v425
      %v494 = vpop.permute.xlu0 %493
      %497 = vset.pattern.permute.xlu0 0
      %498 = vperm.xlu0 %497, %v440
      %v499 = vpop.permute.xlu0 %498
      %502 = vset.pattern.permute.xlu0 0
      %503 = vperm.xlu0 %502, %v455
      %v504 = vpop.permute.xlu0 %503
      %507 = vset.pattern.permute.xlu0 0
      %508 = vperm.xlu0 %507, %v470
      %v509 = vpop.permute.xlu0 %508
      %v511 = vmul.f32 %v171, %v474
      %v512 = vmul.f32 %v172, %v474
      %v513 = vmul.f32 %v173, %v479
      %v514 = vmul.f32 %v174, %v479
      %v515 = vmul.f32 %v175, %v484
      %v516 = vmul.f32 %v176, %v484
      %v517 = vmul.f32 %v177, %v489
      %v518 = vmul.f32 %v178, %v489
      %v519 = vmul.f32 %v179, %v494
      %v520 = vmul.f32 %v180, %v494
      %v521 = vmul.f32 %v181, %v499
      %v522 = vmul.f32 %v182, %v499
      %v523 = vmul.f32 %v183, %v504
      %v524 = vmul.f32 %v184, %v504
      %v525 = vmul.f32 %v185, %v509
      %v526 = vmul.f32 %v186, %v509
      %527 = vst [vmem:[%s170] sm:$0xff] %v511
      %528 = vst [vmem:[%s170 + $0x8] sm:$0xff] %v512
      %529 = vst [vmem:[%s170 + $0x10] sm:$0xff] %v513
      %530 = vst [vmem:[%s170 + $0x18] sm:$0xff] %v514
      %531 = vst [vmem:[%s170 + $0x20] sm:$0xff] %v515
      %532 = vst [vmem:[%s170 + $0x28] sm:$0xff] %v516
      %533 = vst [vmem:[%s170 + $0x30] sm:$0xff] %v517
      %534 = vst [vmem:[%s170 + $0x38] sm:$0xff] %v518
      %535 = vst [vmem:[%s170 + $0x40] sm:$0xff] %v519
      %536 = vst [vmem:[%s170 + $0x48] sm:$0xff] %v520
      %537 = vst [vmem:[%s170 + $0x50] sm:$0xff] %v521
      %538 = vst [vmem:[%s170 + $0x58] sm:$0xff] %v522
      %539 = vst [vmem:[%s170 + $0x60] sm:$0xff] %v523
      %540 = vst [vmem:[%s170 + $0x68] sm:$0xff] %v524
      %541 = vst [vmem:[%s170 + $0x70] sm:$0xff] %v525
      %542 = vst [vmem:[%s170 + $0x78] sm:$0xff] %v526
      %p543 = scmp.lt.s32.totalorder %s14, 1
      %s544 = scalar_select %p543, %s14, 1
      %s545 = smul.addr %s544, 16
      %s546 = smul.addr %s545, 8
      %s547 = scalar_lea.vmem %s3, %s546
      // Predicated region
      $region33: #{squeeze_excite.1} parent=31 // pred_check
        %p548 = pneg %p100
      $region34: #{squeeze_excite.1} parent=31 // pred_check_branch
        %550 = sbr.rel (%p548) target = $region36
      $region35: #{squeeze_excite.1} parent=31 // pred_region
        _
      $region36: #{squeeze_excite.1} parent=31 // pred_fallthru
        _
    $region32: #{squeeze_excite.1} parent=5 // pred_fallthru
      _
    %p551 = scmp.le.s32.totalorder 2, %s9
    // Predicated region
    $region37: #{squeeze_excite.1} parent=5 // pred_check
      %p552 = pneg %p551
    $region38: #{squeeze_excite.1} parent=5 // pred_check_branch
      %554 = sbr.rel (%p552) target = $region40
    $region39: #{squeeze_excite.1} parent=5 // pred_region
      %s555 = ssub.s32 %s9, 2
      // Predicated region
      $region41: #{squeeze_excite.1} parent=39 // pred_check
        %p556 = pneg %p106
      $region42: #{squeeze_excite.1} parent=39 // pred_check_branch
        %558 = sbr.rel (%p556) target = $region44
      $region43: #{squeeze_excite.1} parent=39 // pred_region
        %p559 = scmp.lt.s32.totalorder %s15, 1
        %s560 = scalar_select %p559, %s15, 1
        %s561 = smul.addr %s560, 16
        %s562 = smul.addr %s561, 8
        %s563 = scalar_lea.vmem %s3, %s562
      $region44: #{squeeze_excite.1} parent=39 // pred_fallthru
        _
    $region40: #{squeeze_excite.1} parent=5 // pred_fallthru
      _
  $region6: #{squeeze_excite.1} parent=0 // loop_footer
    %s13 = sadd.s32 1, %s9
  $region7: #{squeeze_excite.1} parent=0 // loop_footer_branch
    %8 = sbr.rel target = $region3
  $region8: #{squeeze_excite.1} parent=0 // loop_exit
    _

</llo_original>
